<compile_context>
chip_gen: v6e
topology: v6e:2x2x1
jax: 0.10.0
libtpu: 0.0.40
codegen_flags: <defaults>
</compile_context>

<pallas_src>
import math

import jax
import jax.numpy as jnp
from jax.experimental import pallas as pl
from jax.experimental.pallas import tpu as pltpu


_ROW_ALIGN = 16   # row tiles kept multiples of 16 (covers f32 and bf16 sublane packing)


def _round_up(x, m):
    return ((x + m - 1) // m) * m


def _vmem_capacity_bytes():
    """Generation-aware VMEM capacity (v5e/v6e 128 MiB, v7x 64 MiB per TC)."""
    try:
        return int(pltpu.get_tpu_info().vmem_capacity_bytes)
    except Exception:
        return 64 << 20   # conservative fallback (v7x per-TensorCore)


def _pick_tm(n_rows, row_bytes, static_bytes, tm_max=512):
    """Row tile: big enough to approach the HBM roofline (>=512 where VMEM allows),
    small enough for double-buffered in/out blocks + resident weights on the
    smallest generation, and capped so the row grid keeps >= 4 steps (so v7x's two
    TensorCores both get work via dimension_semantics=("parallel",))."""
    budget = max((_vmem_capacity_bytes() // 4) - static_bytes, 1 << 20)
    tm = tm_max
    while tm > _ROW_ALIGN and 2 * tm * row_bytes > budget:
        tm //= 2
    tm = min(tm, _round_up(pl.cdiv(n_rows, 4), _ROW_ALIGN))   # >=4 grid steps (v7x)
    tm = min(tm, _round_up(n_rows, _ROW_ALIGN))               # don't exceed the data
    return max(_ROW_ALIGN, tm)


def _compiler_params():
    return pltpu.CompilerParams(
        dimension_semantics=("parallel",),
        vmem_limit_bytes=_vmem_capacity_bytes() // 2,
    )


# ----------------------------------------------------------------------------- kernels

def _linear_kernel(x_ref, w_ref, b_ref, o_ref):
    # y = x @ W + b ; W is [in, out] in the compute dtype, f32 accumulation.
    acc = jnp.dot(x_ref[...].astype(w_ref.dtype), w_ref[...],
                  preferred_element_type=jnp.float32)
    o_ref[...] = (acc + b_ref[...]).astype(o_ref.dtype)


def _fused_kernel(s_ref, v_ref, ws_ref, bs_ref, wv_ref, bv_ref, so_ref, vo_ref):
    # Scalar branch.
    acc_s = jnp.dot(s_ref[...].astype(ws_ref.dtype), ws_ref[...],
                    preferred_element_type=jnp.float32)
    so_ref[...] = (acc_s + bs_ref[...]).astype(so_ref.dtype)
    # Vector branch as one lane-dense matmul on the flat (tm, 3*vi) view.
    acc_v = jnp.dot(v_ref[...].astype(wv_ref.dtype), wv_ref[...],
                    preferred_element_type=jnp.float32)
    vo_ref[...] = (acc_v + bv_ref[...]).astype(vo_ref.dtype)


# ----------------------------------------------------------------------------- wrappers

def _pallas_linear(x2d, w_io, b_1o, out_dtype):
    """x2d [M, K]; w_io [K, O] (pre-transposed, compute dtype); b_1o [1, O] f32."""
    M, K = x2d.shape
    O = w_io.shape[1]
    in_b = x2d.dtype.itemsize
    out_b = jnp.dtype(out_dtype).itemsize
    w_b = w_io.dtype.itemsize
    static = 2 * (w_io.size * w_b + b_1o.size * b_1o.dtype.itemsize)
    tm = _pick_tm(M, in_b * K + out_b * O, static)

    return pl.pallas_call(
        _linear_kernel,
        out_shape=jax.ShapeDtypeStruct((M, O), out_dtype),
        grid=(pl.cdiv(M, tm),),                                   # ragged last block OK
        in_specs=[
            pl.BlockSpec((tm, K), lambda i: (i, 0)),
            pl.BlockSpec((K, O), lambda i: (0, 0)),               # weight: VMEM-resident
            pl.BlockSpec((1, O), lambda i: (0, 0)),               # bias:   VMEM-resident
        ],
        out_specs=pl.BlockSpec((tm, O), lambda i: (i, 0)),
        compiler_params=_compiler_params(),
        cost_estimate=pl.CostEstimate(
            flops=2 * M * K * O,
            transcendentals=0,
            bytes_accessed=in_b * M * K + w_b * K * O + out_b * M * O,
        ),
    )(x2d, w_io, b_1o)


def _pallas_tuple_linear(s2d, v2d, ws, bs, wv, bv, out_dtype):
    """Fused scalar + vector linear. s2d [M, si], v2d [M, 3*vi] (free flat view)."""
    M, si = s2d.shape
    kv = v2d.shape[1]
    so = ws.shape[1]
    vo3 = wv.shape[1]
    in_b = s2d.dtype.itemsize
    out_b = jnp.dtype(out_dtype).itemsize
    w_b = ws.dtype.itemsize
    static = 2 * (ws.size * w_b + wv.size * w_b
                  + bs.size * bs.dtype.itemsize + bv.size * bv.dtype.itemsize)
    row_bytes = in_b * (si + kv) + out_b * (so + vo3)
    tm = _pick_tm(M, row_bytes, static)

    return pl.pallas_call(
        _fused_kernel,
        out_shape=(jax.ShapeDtypeStruct((M, so), out_dtype),
                   jax.ShapeDtypeStruct((M, vo3), out_dtype)),
        grid=(pl.cdiv(M, tm),),                                   # ragged last block OK
        in_specs=[
            pl.BlockSpec((tm, si), lambda i: (i, 0)),
            pl.BlockSpec((tm, kv), lambda i: (i, 0)),
            pl.BlockSpec((si, so), lambda i: (0, 0)),             # resident parameters
            pl.BlockSpec((1, so), lambda i: (0, 0)),
            pl.BlockSpec((kv, vo3), lambda i: (0, 0)),
            pl.BlockSpec((1, vo3), lambda i: (0, 0)),
        ],
        out_specs=(pl.BlockSpec((tm, so), lambda i: (i, 0)),
                   pl.BlockSpec((tm, vo3), lambda i: (i, 0))),
        compiler_params=_compiler_params(),
        cost_estimate=pl.CostEstimate(
            flops=2 * M * (si * so + kv * vo3),
            transcendentals=0,
            bytes_accessed=(in_b * M * (si + kv)
                            + w_b * (si * so + kv * vo3)
                            + out_b * M * (so + vo3)),
        ),
    )(s2d, v2d, ws, bs, wv, bv)


# ----------------------------------------------------------------------------- module

class TupleLinearPallas:
    """JAX/Pallas port of TupleLinear.

    compute_dtype: MXU input dtype (weights pre-cast once; activations cast
                   in-kernel). bf16 default; pass jnp.float32 for bit-faithful math.
    out_dtype:     output dtype; None -> same as the scalar input's dtype. Pass
                   jnp.bfloat16 to halve output HBM traffic when downstream allows.
    """

    def __init__(self, in_dims, out_dims, bias=True, key=None,
                 compute_dtype=jnp.bfloat16, out_dtype=None):
        if key is None:
            key = jax.random.PRNGKey(0)
        self.si, self.vi = in_dims
        self.so, self.vo = out_dims
        assert self.si and self.so
        self.out_dtype = out_dtype
        k1, k2, k3, k4 = jax.random.split(key, 4)

        # deterministic init mimicking nn.Linear, kept in f32 for the reference
        lim_s = 1.0 / math.sqrt(self.si)
        self.ws_w = jax.random.uniform(k1, (self.so, self.si), jnp.float32, -lim_s, lim_s)
        self.ws_b = (jax.random.uniform(k2, (self.so,), jnp.float32, -lim_s, lim_s)
                     if bias else jnp.zeros((self.so,), jnp.float32))

        # ---- kernel-ready layouts (built once, never per call) ----
        # scalar weight transposed to [si, so] at exact width; bias as a [1, so]
        # f32 row (added onto the f32 accumulator inside the kernel).
        self.ws_k = self.ws_w.T.astype(compute_dtype)
        self.bs_k = self.ws_b.reshape(1, self.so)

        if self.vi and self.vo:
            lim_v = 1.0 / math.sqrt(self.vi)
            self.wv_w = jax.random.uniform(k3, (self.vo, self.vi), jnp.float32, -lim_v, lim_v)
            self.wv_b = (jax.random.uniform(k4, (self.vo,), jnp.float32, -lim_v, lim_v)
                         if bias else jnp.zeros((self.vo,), jnp.float32))
            # vector branch as a single lane-dense matmul on v.reshape(N, 3*vi):
            #   out[n, o*3+c] = sum_i wv[o, i] * v[n, i*3+c] + b[o]
            #   => W_exp[(i*3+c), (o*3+d)] = wv[o, i] * delta(c, d)   (kron(W, I3))
            # TODO(synk): for large vi*vo on v5e this does 3x the MACs / 9x the weight
            # bytes; switch to a 3-channel loop / channel-major layout there.
            w_exp = jnp.einsum('oi,cd->icod', self.wv_w, jnp.eye(3, dtype=jnp.float32))
            self.wv_k = w_exp.reshape(3 * self.vi, 3 * self.vo).astype(compute_dtype)
            self.bv_k = jnp.repeat(self.wv_b, 3).reshape(1, 3 * self.vo)   # index o*3+c
        else:
            self.wv_w = None
            self.wv_b = None

    def __call__(self, x):
        if self.vi:
            s, v = x
            n = s.shape[0]
            odt = self.out_dtype if self.out_dtype is not None else s.dtype
            if self.vo:
                v_flat = v.reshape(n, 3 * self.vi)                 # free contiguous view
                s_out, v_out = _pallas_tuple_linear(
                    s, v_flat, self.ws_k, self.bs_k, self.wv_k, self.bv_k, odt)
                return s_out, v_out.reshape(n, self.vo, 3)         # free view
            return _pallas_linear(s, self.ws_k, self.bs_k, odt)
        n = x.shape[0]
        odt = self.out_dtype if self.out_dtype is not None else x.dtype
        s_out = _pallas_linear(x, self.ws_k, self.bs_k, odt)
        if self.vo:
            return s_out, jnp.zeros((n, self.vo, 3), dtype=s_out.dtype)
        return s_out


# ----------------------------------------------------------------------------- reference

def _reference(module, x):
    """Pure-JAX f32 reference (mirrors the PyTorch forward exactly)."""
    if module.vi:
        s, v = x
        s_out = s @ module.ws_w.T + module.ws_b
        if module.vo:
            vt = jnp.swapaxes(v, -1, -2)
            v_out = jnp.swapaxes(vt @ module.wv_w.T + module.wv_b, -1, -2)
            return s_out, v_out
        return s_out
    s_out = x @ module.ws_w.T + module.ws_b
    if module.vo:
        return s_out, jnp.zeros((s_out.shape[0], module.vo, 3), s_out.dtype)
    return s_out


if __name__ == "__main__":
    key = jax.random.PRNGKey(0)
    k_s, k_v, k_p = jax.random.split(key, 3)

    # N chosen so the row grid has several steps AND a ragged last block
    # (exercises the pl.cdiv grid path); feature dims stay small.
    N = 72
    in_dims = (32, 16)    # (si, vi)
    out_dims = (64, 32)   # (so, vo)

    s_in = jax.random.normal(k_s, (N, in_dims[0]), jnp.float32)
    v_in = jax.random.normal(k_v, (N, in_dims[1], 3), jnp.float32)

    mod = TupleLinearPallas(in_dims, out_dims, bias=True, key=k_p)

    s_out, v_out = mod((s_in, v_in))
    s_out = jax.block_until_ready(s_out)
    v_out = jax.block_until_ready(v_out)

    s_ref, v_ref = _reference(mod, (s_in, v_in))
    assert s_out.shape == (N, out_dims[0])
    assert v_out.shape == (N, out_dims[1], 3)
    # bf16 MXU inputs with f32 accumulation -> looser tolerance vs the f32 reference
    assert jnp.allclose(s_out, s_ref, atol=5e-2, rtol=5e-2), \
        float(jnp.max(jnp.abs(s_out - s_ref)))
    assert jnp.allclose(v_out, v_ref, atol=5e-2, rtol=5e-2), \
        float(jnp.max(jnp.abs(v_out - v_ref)))

    # exercise the scalar-only path (vi = 0, vo = 0) as well
    mod_s = TupleLinearPallas((32, 0), (64, 0), bias=True, key=k_p)
    s_only = jax.block_until_ready(mod_s(s_in))
    s_only_ref = _reference(mod_s, s_in)
    assert s_only.shape == (N, 64)
    assert jnp.allclose(s_only, s_only_ref, atol=5e-2, rtol=5e-2)

    print("KERNEL_OK")
</pallas_src>

<mosaic_0001>
module attributes {stable_mosaic.version = 11 : i64} {
  func.func @_fused_kernel(%arg0: i32, %arg1: memref<32x32xf32, #tpu.memory_space<vmem>>, %arg2: memref<32x48xf32, #tpu.memory_space<vmem>>, %arg3: memref<32x64xbf16, #tpu.memory_space<vmem>>, %arg4: memref<1x64xf32, #tpu.memory_space<vmem>>, %arg5: memref<48x96xbf16, #tpu.memory_space<vmem>>, %arg6: memref<1x96xf32, #tpu.memory_space<vmem>>, %arg7: memref<32x64xf32, #tpu.memory_space<vmem>>, %arg8: memref<32x96xf32, #tpu.memory_space<vmem>>) attributes {dimension_semantics = [#tpu.dimension_semantics<parallel>], iteration_bounds = array<i64: 3>, scalar_prefetch = 0 : i64, scratch_operands = 0 : i64, tpu.core_type = #tpu.core_type<tc>, window_params = [{transform_indices = @transform_0, window_bounds = array<i64: 32, 32>}, {transform_indices = @transform_1, window_bounds = array<i64: 32, 48>}, {pipeline_mode = #tpu.pipeline_mode<synchronous>, transform_indices = @transform_2, window_bounds = array<i64: 32, 64>}, {pipeline_mode = #tpu.pipeline_mode<synchronous>, transform_indices = @transform_3, window_bounds = array<i64: 1, 64>}, {pipeline_mode = #tpu.pipeline_mode<synchronous>, transform_indices = @transform_4, window_bounds = array<i64: 48, 96>}, {pipeline_mode = #tpu.pipeline_mode<synchronous>, transform_indices = @transform_5, window_bounds = array<i64: 1, 96>}, {transform_indices = @transform_6, window_bounds = array<i64: 32, 64>}, {transform_indices = @transform_7, window_bounds = array<i64: 32, 96>}]} {
    %c0 = arith.constant 0 : index
    %c0_0 = arith.constant 0 : index
    %0 = vector.load %arg1[%c0, %c0_0] : memref<32x32xf32, #tpu.memory_space<vmem>>, vector<32x32xf32>
    %1 = arith.truncf %0 : vector<32x32xf32> to vector<32x32xbf16>
    %c0_1 = arith.constant 0 : index
    %c0_2 = arith.constant 0 : index
    %2 = vector.load %arg3[%c0_1, %c0_2] : memref<32x64xbf16, #tpu.memory_space<vmem>>, vector<32x64xbf16>
    %cst = arith.constant dense<0.000000e+00> : vector<32x64xf32>
    %3 = tpu.matmul %1, %2, %cst {dimension_numbers = #tpu.dot_dimension_numbers<[1], [0], [0], [1], [0, 0, 1, 1], [], []>} : vector<32x32xbf16>, vector<32x64xbf16>, vector<32x64xf32> -> vector<32x64xf32>
    %c0_3 = arith.constant 0 : index
    %c0_4 = arith.constant 0 : index
    %4 = vector.load %arg4[%c0_3, %c0_4] : memref<1x64xf32, #tpu.memory_space<vmem>>, vector<1x64xf32>
    %5 = vector.broadcast %4 : vector<1x64xf32> to vector<32x64xf32>
    %6 = arith.addf %3, %5 : vector<32x64xf32>
    %c0_5 = arith.constant 0 : index
    %c0_6 = arith.constant 0 : index
    %7 = vector.load %arg7[%c0_5, %c0_6] : memref<32x64xf32, #tpu.memory_space<vmem>>, vector<32x64xf32>
    tpu.vector_store %arg7[%c0_5, %c0_6], %6 {strides = array<i32>} : memref<32x64xf32, #tpu.memory_space<vmem>>, vector<32x64xf32>,
    %c0_7 = arith.constant 0 : index
    %c0_8 = arith.constant 0 : index
    %8 = vector.load %arg2[%c0_7, %c0_8] : memref<32x48xf32, #tpu.memory_space<vmem>>, vector<32x48xf32>
    %9 = arith.truncf %8 : vector<32x48xf32> to vector<32x48xbf16>
    %c0_9 = arith.constant 0 : index
    %c0_10 = arith.constant 0 : index
    %10 = vector.load %arg5[%c0_9, %c0_10] : memref<48x96xbf16, #tpu.memory_space<vmem>>, vector<48x96xbf16>
    %cst_11 = arith.constant dense<0.000000e+00> : vector<32x96xf32>
    %11 = tpu.matmul %9, %10, %cst_11 {dimension_numbers = #tpu.dot_dimension_numbers<[1], [0], [0], [1], [0, 0, 1, 1], [], []>} : vector<32x48xbf16>, vector<48x96xbf16>, vector<32x96xf32> -> vector<32x96xf32>
    %c0_12 = arith.constant 0 : index
    %c0_13 = arith.constant 0 : index
    %12 = vector.load %arg6[%c0_12, %c0_13] : memref<1x96xf32, #tpu.memory_space<vmem>>, vector<1x96xf32>
    %13 = vector.broadcast %12 : vector<1x96xf32> to vector<32x96xf32>
    %14 = arith.addf %11, %13 : vector<32x96xf32>
    %c0_14 = arith.constant 0 : index
    %c0_15 = arith.constant 0 : index
    %15 = vector.load %arg8[%c0_14, %c0_15] : memref<32x96xf32, #tpu.memory_space<vmem>>, vector<32x96xf32>
    tpu.vector_store %arg8[%c0_14, %c0_15], %14 {strides = array<i32>} : memref<32x96xf32, #tpu.memory_space<vmem>>, vector<32x96xf32>,
    return
  }
  func.func @transform_0(%arg0: i32) -> (i32, i32) {
    %c0_i32 = arith.constant 0 : i32
    %c0_i32_0 = arith.constant 0 : i32
    return %arg0, %c0_i32 : i32, i32
  }
  func.func @transform_1(%arg0: i32) -> (i32, i32) {
    %c0_i32 = arith.constant 0 : i32
    %c0_i32_0 = arith.constant 0 : i32
    return %arg0, %c0_i32 : i32, i32
  }
  func.func @transform_2(%arg0: i32) -> (i32, i32) {
    %c0_i32 = arith.constant 0 : i32
    %c0_i32_0 = arith.constant 0 : i32
    %c0_i32_1 = arith.constant 0 : i32
    return %c0_i32, %c0_i32_0 : i32, i32
  }
  func.func @transform_3(%arg0: i32) -> (i32, i32) {
    %c0_i32 = arith.constant 0 : i32
    %c0_i32_0 = arith.constant 0 : i32
    %c0_i32_1 = arith.constant 0 : i32
    return %c0_i32, %c0_i32_0 : i32, i32
  }
  func.func @transform_4(%arg0: i32) -> (i32, i32) {
    %c0_i32 = arith.constant 0 : i32
    %c0_i32_0 = arith.constant 0 : i32
    %c0_i32_1 = arith.constant 0 : i32
    return %c0_i32, %c0_i32_0 : i32, i32
  }
  func.func @transform_5(%arg0: i32) -> (i32, i32) {
    %c0_i32 = arith.constant 0 : i32
    %c0_i32_0 = arith.constant 0 : i32
    %c0_i32_1 = arith.constant 0 : i32
    return %c0_i32, %c0_i32_0 : i32, i32
  }
  func.func @transform_6(%arg0: i32) -> (i32, i32) {
    %c0_i32 = arith.constant 0 : i32
    %c0_i32_0 = arith.constant 0 : i32
    return %arg0, %c0_i32 : i32, i32
  }
  func.func @transform_7(%arg0: i32) -> (i32, i32) {
    %c0_i32 = arith.constant 0 : i32
    %c0_i32_0 = arith.constant 0 : i32
    return %arg0, %c0_i32 : i32, i32
  }
}

</mosaic_0001>

<llo_original>
// kernel: tpu_custom_call.1
$region0: #{tpu_custom_call.1}
  #allocation0 [shape = 'u32[]', space=smem, size = 0x4, offset = 0x4, fixed_abs, tag = 'smem constant byte address 0x4 - core index']
  #allocation1 [shape = 'u32[144,128]{1,0:T(1,128)}', space=vmem, size = 0x12000, scoped, tag = 'internal scratch']
  %s0 = inlined_call_operand.vmem [shape: f32[72,32], index: 0, kind: input, shape index: {}]
  %s1 = inlined_call_operand.vmem [shape: f32[72,48], index: 1, kind: input, shape index: {}]
  %s2 = inlined_call_operand.vmem [shape: bf16[32,64], index: 2, kind: input, shape index: {}]
  %s3 = inlined_call_operand.vmem [shape: f32[1,64], index: 3, kind: input, shape index: {}]
  %s4 = inlined_call_operand.vmem [shape: bf16[48,96], index: 4, kind: input, shape index: {}]
  %s5 = inlined_call_operand.vmem [shape: f32[1,96], index: 5, kind: input, shape index: {}]
  %s6 = inlined_call_operand.vmem [shape: f32[72,64], index: 6, kind: output, shape index: {0}]
  %s7 = inlined_call_operand.hbm [shape: f32[72,96], index: 7, kind: output, shape index: {1}]
  %8 = xla_tuple %s6, %s7
  %s9 = sld [smem:[#allocation0]]
  $region113: #{tpu_custom_call.1} parent=0
    _
  %s11 = ssub.s32 1, %s9
  %s12 = scalar_select 0, %s11, %s9
  $region1: #{tpu_custom_call.1} parent=0
    #allocation2 [shape = 'u8[32768]{0}', space=vmem, size = 0x8000, scoped, tag = 'output window, operand 0']
    #allocation3 [shape = 'u8[32768]{0}', space=vmem, size = 0x8000, scoped, tag = 'output window, operand 1']
    #allocation4 [shape = 's32[2]{0}', space=sflag, size = 0x8, scoped, tag = 'scoped memory for tpu_custom_call.1']
    %13 = vsyncpa [#allocation4], 0
    %s14 = scalar_lea.sflag [#allocation4], 1
    %15 = vsyncpa %s14, 0
    loop: start=0, step=1, limit=5
    $region2: #{tpu_custom_call.1} parent=1 // loop_pre_header
      _
    $region3: #{tpu_custom_call.1} parent=1 // loop_header
      %s17 = sphi 0, %s21
      %p18 = scmp.ge.s32.totalorder %s17, 5
      %s27 = sphi 0, %s29
      %s30 = sphi 0, %s27
      %s31 = sphi 0, %s30
      %s47 = sphi 0, %s31
      %s53 = sphi 0, %s55
      %s56 = sphi 0, %s53
      %s57 = sphi 0, %s56
      %s73 = sphi 0, %s57
      %s77 = sphi 0, %s77
      %s79 = sphi 0, %s77
      %s80 = sphi 0, %s79
      %s94 = sphi 0, %s80
      %s98 = sphi 0, %s98
      %s100 = sphi 0, %s98
      %s101 = sphi 0, %s100
      %s115 = sphi 0, %s101
      %s119 = sphi 0, %s119
      %s121 = sphi 0, %s119
      %s122 = sphi 0, %s121
      %s136 = sphi 0, %s122
      %s140 = sphi 0, %s140
      %s142 = sphi 0, %s140
      %s143 = sphi 0, %s142
      %s157 = sphi 0, %s143
      %s163 = sphi 0, %s165
      %s166 = sphi 0, %s163
      %s167 = sphi 0, %s166
      %s183 = sphi 0, %s167
      %s189 = sphi 0, %s191
      %s192 = sphi 0, %s189
      %s193 = sphi 0, %s192
      %s209 = sphi 0, %s193
    $region4: #{tpu_custom_call.1} parent=1 // loop_header_branch
      %20 = sbr.rel (%p18) target = $region8
    $region5: #{tpu_custom_call.1} parent=1 // loop_body
      %s22 = ssub.s32 %s17, 1
      %s23 = ssub.s32 %s17, 2
      %s24 = sadd.s32 %s17, 1
      %s25 = ssub.s32 %s17, %s24
      %p26 = scmp.eq.s32.totalorder %s25, 0
      %s28 = sadd.s32 %s27, 1
      %s29 = scalar_select %p26, %s27, %s28
      %p32 = pneg %p26
      %p33 = scmp.eq.s32.totalorder %s17, 2
      %p34 = por %p32, %p33
      %p35 = scmp.ne.s32.totalorder %s27, %s30
      %p36 = scmp.eq.s32.totalorder %s17, 0
      %p37 = por %p35, %p36
      %p38 = scmp.ne.s32.totalorder %s27, %s30
      %p39 = scmp.eq.s32.totalorder %s22, 2
      %p40 = por %p38, %p39
      %p41 = scmp.ne.s32.totalorder %s30, %s31
      %p42 = scmp.eq.s32.totalorder %s22, 0
      %p43 = por %p41, %p42
      %p44 = scmp.ne.s32.totalorder %s30, %s31
      %p45 = scmp.eq.s32.totalorder %s23, 2
      %p46 = por %p44, %p45
      %p48 = scmp.ne.s32.totalorder %s31, %s47
      %p49 = scmp.eq.s32.totalorder %s23, 0
      %p50 = por %p48, %p49
      %s51 = ssub.s32 %s17, %s24
      %p52 = scmp.eq.s32.totalorder %s51, 0
      %s54 = sadd.s32 %s53, 1
      %s55 = scalar_select %p52, %s53, %s54
      %p58 = pneg %p52
      %p59 = scmp.eq.s32.totalorder %s17, 2
      %p60 = por %p58, %p59
      %p61 = scmp.ne.s32.totalorder %s53, %s56
      %p62 = scmp.eq.s32.totalorder %s17, 0
      %p63 = por %p61, %p62
      %p64 = scmp.ne.s32.totalorder %s53, %s56
      %p65 = scmp.eq.s32.totalorder %s22, 2
      %p66 = por %p64, %p65
      %p67 = scmp.ne.s32.totalorder %s56, %s57
      %p68 = scmp.eq.s32.totalorder %s22, 0
      %p69 = por %p67, %p68
      %p70 = scmp.ne.s32.totalorder %s56, %s57
      %p71 = scmp.eq.s32.totalorder %s23, 2
      %p72 = por %p70, %p71
      %p74 = scmp.ne.s32.totalorder %s57, %s73
      %p75 = scmp.eq.s32.totalorder %s23, 0
      %p76 = por %p74, %p75
      %s78 = sadd.s32 %s77, 1
      %p81 = scmp.eq.s32.totalorder %s17, 2
      %p82 = scmp.ne.s32.totalorder %s77, %s79
      %p83 = scmp.eq.s32.totalorder %s17, 0
      %p84 = por %p82, %p83
      %p85 = scmp.ne.s32.totalorder %s77, %s79
      %p86 = scmp.eq.s32.totalorder %s22, 2
      %p87 = por %p85, %p86
      %p88 = scmp.ne.s32.totalorder %s79, %s80
      %p89 = scmp.eq.s32.totalorder %s22, 0
      %p90 = por %p88, %p89
      %p91 = scmp.ne.s32.totalorder %s79, %s80
      %p92 = scmp.eq.s32.totalorder %s23, 2
      %p93 = por %p91, %p92
      %p95 = scmp.ne.s32.totalorder %s80, %s94
      %p96 = scmp.eq.s32.totalorder %s23, 0
      %p97 = por %p95, %p96
      %s99 = sadd.s32 %s98, 1
      %p102 = scmp.eq.s32.totalorder %s17, 2
      %p103 = scmp.ne.s32.totalorder %s98, %s100
      %p104 = scmp.eq.s32.totalorder %s17, 0
      %p105 = por %p103, %p104
      %p106 = scmp.ne.s32.totalorder %s98, %s100
      %p107 = scmp.eq.s32.totalorder %s22, 2
      %p108 = por %p106, %p107
      %p109 = scmp.ne.s32.totalorder %s100, %s101
      %p110 = scmp.eq.s32.totalorder %s22, 0
      %p111 = por %p109, %p110
      %p112 = scmp.ne.s32.totalorder %s100, %s101
      %p113 = scmp.eq.s32.totalorder %s23, 2
      %p114 = por %p112, %p113
      %p116 = scmp.ne.s32.totalorder %s101, %s115
      %p117 = scmp.eq.s32.totalorder %s23, 0
      %p118 = por %p116, %p117
      %s120 = sadd.s32 %s119, 1
      %p123 = scmp.eq.s32.totalorder %s17, 2
      %p124 = scmp.ne.s32.totalorder %s119, %s121
      %p125 = scmp.eq.s32.totalorder %s17, 0
      %p126 = por %p124, %p125
      %p127 = scmp.ne.s32.totalorder %s119, %s121
      %p128 = scmp.eq.s32.totalorder %s22, 2
      %p129 = por %p127, %p128
      %p130 = scmp.ne.s32.totalorder %s121, %s122
      %p131 = scmp.eq.s32.totalorder %s22, 0
      %p132 = por %p130, %p131
      %p133 = scmp.ne.s32.totalorder %s121, %s122
      %p134 = scmp.eq.s32.totalorder %s23, 2
      %p135 = por %p133, %p134
      %p137 = scmp.ne.s32.totalorder %s122, %s136
      %p138 = scmp.eq.s32.totalorder %s23, 0
      %p139 = por %p137, %p138
      %s141 = sadd.s32 %s140, 1
      %p144 = scmp.eq.s32.totalorder %s17, 2
      %p145 = scmp.ne.s32.totalorder %s140, %s142
      %p146 = scmp.eq.s32.totalorder %s17, 0
      %p147 = por %p145, %p146
      %p148 = scmp.ne.s32.totalorder %s140, %s142
      %p149 = scmp.eq.s32.totalorder %s22, 2
      %p150 = por %p148, %p149
      %p151 = scmp.ne.s32.totalorder %s142, %s143
      %p152 = scmp.eq.s32.totalorder %s22, 0
      %p153 = por %p151, %p152
      %p154 = scmp.ne.s32.totalorder %s142, %s143
      %p155 = scmp.eq.s32.totalorder %s23, 2
      %p156 = por %p154, %p155
      %p158 = scmp.ne.s32.totalorder %s143, %s157
      %p159 = scmp.eq.s32.totalorder %s23, 0
      %p160 = por %p158, %p159
      %s161 = ssub.s32 %s17, %s24
      %p162 = scmp.eq.s32.totalorder %s161, 0
      %s164 = sadd.s32 %s163, 1
      %s165 = scalar_select %p162, %s163, %s164
      %p168 = pneg %p162
      %p169 = scmp.eq.s32.totalorder %s17, 2
      %p170 = por %p168, %p169
      %p171 = scmp.ne.s32.totalorder %s163, %s166
      %p172 = scmp.eq.s32.totalorder %s17, 0
      %p173 = por %p171, %p172
      %p174 = scmp.ne.s32.totalorder %s163, %s166
      %p175 = scmp.eq.s32.totalorder %s22, 2
      %p176 = por %p174, %p175
      %p177 = scmp.ne.s32.totalorder %s166, %s167
      %p178 = scmp.eq.s32.totalorder %s22, 0
      %p179 = por %p177, %p178
      %p180 = scmp.ne.s32.totalorder %s166, %s167
      %p181 = scmp.eq.s32.totalorder %s23, 2
      %p182 = por %p180, %p181
      %p184 = scmp.ne.s32.totalorder %s167, %s183
      %p185 = scmp.eq.s32.totalorder %s23, 0
      %p186 = por %p184, %p185
      %s187 = ssub.s32 %s17, %s24
      %p188 = scmp.eq.s32.totalorder %s187, 0
      %s190 = sadd.s32 %s189, 1
      %s191 = scalar_select %p188, %s189, %s190
      %p194 = pneg %p188
      %p195 = scmp.eq.s32.totalorder %s17, 2
      %p196 = por %p194, %p195
      %p197 = scmp.ne.s32.totalorder %s189, %s192
      %p198 = scmp.eq.s32.totalorder %s17, 0
      %p199 = por %p197, %p198
      %p200 = scmp.ne.s32.totalorder %s189, %s192
      %p201 = scmp.eq.s32.totalorder %s22, 2
      %p202 = por %p200, %p201
      %p203 = scmp.ne.s32.totalorder %s192, %s193
      %p204 = scmp.eq.s32.totalorder %s22, 0
      %p205 = por %p203, %p204
      %p206 = scmp.ne.s32.totalorder %s192, %s193
      %p207 = scmp.eq.s32.totalorder %s23, 2
      %p208 = por %p206, %p207
      %p210 = scmp.ne.s32.totalorder %s193, %s209
      %p211 = scmp.eq.s32.totalorder %s23, 0
      %p212 = por %p210, %p211
      %p213 = scmp.le.s32.totalorder 1, %s17
      %p214 = scmp.lt.s32.totalorder %s17, 4
      %p215 = pnand %p213, %p214
      %p216 = pneg %p215
      // Predicated region
      $region9: #{tpu_custom_call.1} parent=5 // pred_check
        _
      $region10: #{tpu_custom_call.1} parent=5 // pred_check_branch
        %218 = sbr.rel (%p215) target = $region12
      $region11: #{tpu_custom_call.1} parent=5 // pred_region
        %s219 = ssub.s32 %s17, 1
        // Predicated region
        $region13: #{tpu_custom_call.1} parent=11 // pred_check
          %p220 = pneg %p90
        $region14: #{tpu_custom_call.1} parent=11 // pred_check_branch
          %222 = sbr.rel (%p220) target = $region16
        $region15: #{tpu_custom_call.1} parent=11 // pred_region
          _
        $region16: #{tpu_custom_call.1} parent=11 // pred_fallthru
          _
        // Predicated region
        $region17: #{tpu_custom_call.1} parent=11 // pred_check
          %p223 = pneg %p111
        $region18: #{tpu_custom_call.1} parent=11 // pred_check_branch
          %225 = sbr.rel (%p223) target = $region20
        $region19: #{tpu_custom_call.1} parent=11 // pred_region
          _
        $region20: #{tpu_custom_call.1} parent=11 // pred_fallthru
          _
        // Predicated region
        $region21: #{tpu_custom_call.1} parent=11 // pred_check
          %p226 = pneg %p132
        $region22: #{tpu_custom_call.1} parent=11 // pred_check_branch
          %228 = sbr.rel (%p226) target = $region24
        $region23: #{tpu_custom_call.1} parent=11 // pred_region
          _
        $region24: #{tpu_custom_call.1} parent=11 // pred_fallthru
          _
        // Predicated region
        $region25: #{tpu_custom_call.1} parent=11 // pred_check
          %p229 = pneg %p153
        $region26: #{tpu_custom_call.1} parent=11 // pred_check_branch
          %231 = sbr.rel (%p229) target = $region28
        $region27: #{tpu_custom_call.1} parent=11 // pred_region
          _
        $region28: #{tpu_custom_call.1} parent=11 // pred_fallthru
          _
      $region12: #{tpu_custom_call.1} parent=5 // pred_fallthru
        _
      %p232 = scmp.lt.s32.totalorder %s17, 3
      // Predicated region
      $region29: #{tpu_custom_call.1} parent=5 // pred_check
        %p233 = pneg %p232
      $region30: #{tpu_custom_call.1} parent=5 // pred_check_branch
        %235 = sbr.rel (%p233) target = $region32
      $region31: #{tpu_custom_call.1} parent=5 // pred_region
        // Predicated region
        $region33: #{tpu_custom_call.1} parent=31 // pred_check
          %p236 = pneg %p37
        $region34: #{tpu_custom_call.1} parent=31 // pred_check_branch
          %238 = sbr.rel (%p236) target = $region36
        $region35: #{tpu_custom_call.1} parent=31 // pred_region
          %s239 = smul.u32 4, %s17
          %s240 = ssub.s32 9, %s239
          %p241 = scmp.lt.s32.totalorder %s240, 4
          %s242 = scalar_select %p241, %s240, 4
          %s243 = smul.u32 128, %s242
          %p244 = scmp.lt.s32.totalorder %s239, 8
          %s245 = scalar_select %p244, %s239, 8
          %s246 = smul.addr %s245, 8
          %s247 = scalar_lea.vmem %s0, %s246
          %s248 = smul.u32 4, %s17
          %s249 = ssub.s32 9, %s248
          %p250 = scmp.lt.s32.totalorder %s249, 4
          %s251 = scalar_select %p250, %s249, 4
          %s252 = smul.u32 128, %s251
        $region36: #{tpu_custom_call.1} parent=31 // pred_fallthru
          _
        // Predicated region
        $region37: #{tpu_custom_call.1} parent=31 // pred_check
          %p253 = pneg %p63
        $region38: #{tpu_custom_call.1} parent=31 // pred_check_branch
          %255 = sbr.rel (%p253) target = $region40
        $region39: #{tpu_custom_call.1} parent=31 // pred_region
          %s256 = smul.u32 4, %s17
          %s257 = ssub.s32 9, %s256
          %p258 = scmp.lt.s32.totalorder %s257, 4
          %s259 = scalar_select %p258, %s257, 4
          %s260 = smul.u32 128, %s259
          %p261 = scmp.lt.s32.totalorder %s256, 8
          %s262 = scalar_select %p261, %s256, 8
          %s263 = smul.addr %s262, 8
          %s264 = scalar_lea.vmem %s1, %s263
          %s265 = smul.u32 4, %s17
          %s266 = ssub.s32 9, %s265
          %p267 = scmp.lt.s32.totalorder %s266, 4
          %s268 = scalar_select %p267, %s266, 4
          %s269 = smul.u32 128, %s268
        $region40: #{tpu_custom_call.1} parent=31 // pred_fallthru
          _
      $region32: #{tpu_custom_call.1} parent=5 // pred_fallthru
        _
      %p270 = scmp.le.s32.totalorder 1, %s17
      %p271 = scmp.lt.s32.totalorder %s17, 4
      %p272 = pnand %p270, %p271
      %p273 = pneg %p272
      // Predicated region
      $region41: #{tpu_custom_call.1} parent=5 // pred_check
        _
      $region42: #{tpu_custom_call.1} parent=5 // pred_check_branch
        %275 = sbr.rel (%p272) target = $region44
      $region43: #{tpu_custom_call.1} parent=5 // pred_region
        %s276 = ssub.s32 %s17, 1
        %s277 = smul.u32 4, %s22
        %s278 = ssub.s32 9, %s277
        %p279 = scmp.lt.s32.totalorder %s278, 4
        %s280 = scalar_select %p279, %s278, 4
        %s281 = smul.u32 128, %s280
        %p282 = scmp.lt.s32.totalorder %s277, 8
        %s283 = scalar_select %p282, %s277, 8
        %s284 = smul.addr %s283, 8
        %s285 = scalar_lea.vmem %s0, %s284
        %p286 = pneg %p43
        %p287 = pneg %p40
        %s288 = smul.u32 4, %s22
        %s289 = ssub.s32 9, %s288
        %p290 = scmp.lt.s32.totalorder %s289, 4
        %s291 = scalar_select %p290, %s289, 4
        %s292 = smul.u32 128, %s291
        %p293 = scmp.lt.s32.totalorder %s288, 8
        %s294 = scalar_select %p293, %s288, 8
        %s295 = smul.addr %s294, 8
        %s296 = scalar_lea.vmem %s1, %s295
        %p297 = pneg %p69
        %p298 = pneg %p66
        %p299 = pneg %p90
        %p300 = pneg %p87
        %p301 = pneg %p111
        %p302 = pneg %p108
        %p303 = pneg %p132
        %p304 = pneg %p129
        %p305 = pneg %p153
        %p306 = pneg %p150
        %p307 = pneg %p179
        %p308 = pneg %p176
        %s309 = sand.u32 %s166, 1
        %s310 = sand.u32 %s166, 1
        %s311 = smul.addr %s310, 32
        %s312 = scalar_lea.vmem [#allocation2], %s311
        %p313 = pneg %p205
        %p314 = pneg %p202
        %s315 = sand.u32 %s192, 1
        %s316 = scalar_lea.sflag [#allocation4], %s315
        %s317 = sand.u32 %s192, 1
        %s318 = smul.addr %s317, 32
        %s319 = scalar_lea.vmem [#allocation3], %s318
        %s320 = smul.u32 4, %s22
        %s321 = ssub.s32 9, %s320
        %p322 = scmp.lt.s32.totalorder %s321, 4
        %s323 = scalar_select %p322, %s321, 4
        %s324 = smul.u32 128, %s323
        %p325 = scmp.lt.s32.totalorder %s320, 8
        %s326 = scalar_select %p325, %s320, 8
        %s327 = smul.addr %s326, 8
        %s328 = scalar_lea.vmem %s0, %s327
        %s329 = smul.u32 4, %s22
        %s330 = ssub.s32 9, %s329
        %p331 = scmp.lt.s32.totalorder %s330, 4
        %s332 = scalar_select %p331, %s330, 4
        %s333 = smul.u32 128, %s332
        %s334 = smul.u32 4, %s22
        %s335 = ssub.s32 9, %s334
        %p336 = scmp.lt.s32.totalorder %s335, 4
        %s337 = scalar_select %p336, %s335, 4
        %s338 = smul.u32 128, %s337
        %p339 = scmp.lt.s32.totalorder %s334, 8
        %s340 = scalar_select %p339, %s334, 8
        %s341 = smul.addr %s340, 8
        %s342 = scalar_lea.vmem %s1, %s341
        %s343 = smul.u32 4, %s22
        %s344 = ssub.s32 9, %s343
        %p345 = scmp.lt.s32.totalorder %s344, 4
        %s346 = scalar_select %p345, %s344, 4
        %s347 = smul.u32 128, %s346
        %s348 = smul.u32 4, %s22
        %s349 = ssub.s32 9, %s348
        %p350 = scmp.lt.s32.totalorder %s349, 4
        %s351 = scalar_select %p350, %s349, 4
        %s352 = smul.u32 128, %s351
        %s353 = smul.u32 4, %s22
        %s354 = ssub.s32 9, %s353
        %p355 = scmp.lt.s32.totalorder %s354, 4
        %s356 = scalar_select %p355, %s354, 4
        %s357 = smul.u32 128, %s356
        %v359 = vld [vmem:[%s328] sm:$0xff]
        %v360 = vld [vmem:[%s328 + $0x8] sm:$0xff]
        %v361 = vld [vmem:[%s328 + $0x10] sm:$0xff]
        %v362 = vld [vmem:[%s328 + $0x18] sm:$0xff]
        %v363 = vpack.c.bf16 %v360, %v359
        %v364 = vpack.c.bf16 %v362, %v361
        %v365 = vld [vmem:[%s2] sm:$0xf]
        %v366 = vld [vmem:[%s2 + $0x4] sm:$0xf]
        %v367 = vld [vmem:[%s2 + $0x8] sm:$0xf]
        %v368 = vld [vmem:[%s2 + $0xc] sm:$0xf]
        %v369 = vld [vmem:[%s3] sm:$0x1]
        %v371 = vlaneseq
        %v372 = vshrl.u32 %v371, 7
        %v373 = vsub.s32 0, %v372
        %v374 = vrot.slane %v369, %v373
        %v380 = vunpack.c.l.b16 %v365
        %v381 = vunpack.c.l.b16 %v366
        %v382 = vunpack.c.l.b16 %v367
        %v383 = vunpack.c.l.b16 %v368
        %v384 = vpack.c.b16 %v381, %v380
        %v385 = vpack.c.b16 %v383, %v382
        %vm388 = vcmask 261120
        %v390 = vsel %vm388, %v363, 0
        %v393 = vsel %vm388, %v364, 0
        %395 = vmatprep.subr.bf16.mxu0 0
        %396 = vmatpush1.bf16.msra.mxu0 0
        %397 = vmatprep.subr.bf16.mxu0 0
        %398 = vmatpush1.bf16.msra.mxu0 0
        %399 = vmatprep.subr.bf16.mxu0 0
        %400 = vmatpush1.bf16.msra.mxu0 0
        %401 = vmatprep.subr.bf16.mxu0 0
        %402 = vmatpush1.bf16.msra.mxu0 0
        %403 = vmatprep.subr.bf16.mxu0 0
        %404 = vmatpush1.bf16.msra.mxu0 0
        %405 = vmatprep.subr.bf16.mxu0 0
        %406 = vmatpush1.bf16.msra.mxu0 0
        %407 = vmatprep.subr.bf16.mxu0 0
        %408 = vmatpush1.bf16.msra.mxu0 %v385
        %409 = vmatprep.subr.bf16.mxu0 0
        %410 = vmatpush1.bf16.msra.mxu0 %v384
        %411 = vmatprep.subr.bf16.mxu0 0
        %412 = vmatpush2.bf16.msra.mxu0 0
        %413 = vmatprep.subr.bf16.mxu0 0
        %414 = vmatpush2.bf16.msra.mxu0 0
        %415 = vmatprep.subr.bf16.mxu0 0
        %416 = vmatpush2.bf16.msra.mxu0 0
        %417 = vmatprep.subr.bf16.mxu0 0
        %418 = vmatpush2.bf16.msra.mxu0 0
        %419 = vmatprep.subr.bf16.mxu0 0
        %420 = vmatpush2.bf16.msra.mxu0 0
        %421 = vmatprep.subr.bf16.mxu0 0
        %422 = vmatpush2.bf16.msra.mxu0 0
        %423 = vmatprep.subr.bf16.mxu0 0
        %424 = vmatpush2.bf16.msra.mxu0 0
        %425 = vmatprep.subr.bf16.mxu0 0
        %426 = vmatpush2.bf16.msra.mxu0 0
        %427 = vmatprep.mubr.bf16.mxu0 0
        %428 = vmatmul.mubr.bf16.gmra.mxu0 %v390
        %v429 = vpop.f32.mrf.mxu0
        %v430 = vadd.f32 %v374, %v429
        %v431 = vpop.f32.mrf.mxu0
        %v432 = vpop.f32.mrf.mxu0
        %v433 = vadd.f32 %v374, %v432
        %v434 = vpop.f32.mrf.mxu0
        %435 = vmatprep.mubr.bf16.mxu0 0
        %436 = vmatmul.mubr.bf16.gmra.mxu0 %v393
        %v437 = vpop.f32.mrf.mxu0
        %v438 = vadd.f32 %v374, %v437
        %v439 = vpop.f32.mrf.mxu0
        %v440 = vpop.f32.mrf.mxu0
        %v441 = vadd.f32 %v374, %v440
        %v442 = vpop.f32.mrf.mxu0
        %443 = vdwg.mxu0
        %vm444 = vcmask 523264
        %445 = vst.msk [vmem:[%s312] sm:$0xff] %vm444, %v430
        %446 = vst.msk [vmem:[%s312 + $0x8] sm:$0xff] %vm444, %v433
        %447 = vst.msk [vmem:[%s312 + $0x10] sm:$0xff] %vm444, %v438
        %448 = vst.msk [vmem:[%s312 + $0x18] sm:$0xff] %vm444, %v441
        %v449 = vld [vmem:[%s342] sm:$0xff]
        %v450 = vld [vmem:[%s342 + $0x8] sm:$0xff]
        %v451 = vld [vmem:[%s342 + $0x10] sm:$0xff]
        %v452 = vld [vmem:[%s342 + $0x18] sm:$0xff]
        %v453 = vpack.c.bf16 %v450, %v449
        %v454 = vpack.c.bf16 %v452, %v451
        %v455 = vld [vmem:[%s4] sm:$0xf]
        %v456 = vld [vmem:[%s4 + $0x4] sm:$0xf]
        %v457 = vld [vmem:[%s4 + $0x8] sm:$0xf]
        %v458 = vld [vmem:[%s4 + $0xc] sm:$0xf]
        %v459 = vld [vmem:[%s4 + $0x10] sm:$0xf]
        %v460 = vld [vmem:[%s4 + $0x14] sm:$0xf]
        %v461 = vld [vmem:[%s5] sm:$0x1]
        %v463 = vlaneseq
        %v464 = vshrl.u32 %v463, 7
        %v465 = vsub.s32 0, %v464
        %v466 = vrot.slane %v461, %v465
        %v474 = vunpack.c.l.b16 %v455
        %v475 = vunpack.c.l.b16 %v456
        %v476 = vunpack.c.l.b16 %v457
        %v477 = vunpack.c.l.b16 %v458
        %v478 = vunpack.c.l.b16 %v459
        %v479 = vunpack.c.l.b16 %v460
        %v480 = vpack.c.b16 %v475, %v474
        %v481 = vpack.c.b16 %v477, %v476
        %v482 = vpack.c.b16 %v479, %v478
        %vm486 = vcmask 392192
        %v488 = vsel %vm486, %v453, 0
        %v491 = vsel %vm486, %v454, 0
        %493 = vmatprep.subr.bf16.mxu0 0
        %494 = vmatpush1.bf16.msra.mxu0 0
        %495 = vmatprep.subr.bf16.mxu0 0
        %496 = vmatpush1.bf16.msra.mxu0 0
        %497 = vmatprep.subr.bf16.mxu0 0
        %498 = vmatpush1.bf16.msra.mxu0 0
        %499 = vmatprep.subr.bf16.mxu0 0
        %500 = vmatpush1.bf16.msra.mxu0 0
        %501 = vmatprep.subr.bf16.mxu0 0
        %502 = vmatpush1.bf16.msra.mxu0 0
        %503 = vmatprep.subr.bf16.mxu0 0
        %504 = vmatpush1.bf16.msra.mxu0 %v482
        %505 = vmatprep.subr.bf16.mxu0 0
        %506 = vmatpush1.bf16.msra.mxu0 %v481
        %507 = vmatprep.subr.bf16.mxu0 0
        %508 = vmatpush1.bf16.msra.mxu0 %v480
        %509 = vmatprep.subr.bf16.mxu0 0
        %510 = vmatpush2.bf16.msra.mxu0 0
        %511 = vmatprep.subr.bf16.mxu0 0
        %512 = vmatpush2.bf16.msra.mxu0 0
        %513 = vmatprep.subr.bf16.mxu0 0
        %514 = vmatpush2.bf16.msra.mxu0 0
        %515 = vmatprep.subr.bf16.mxu0 0
        %516 = vmatpush2.bf16.msra.mxu0 0
        %517 = vmatprep.subr.bf16.mxu0 0
        %518 = vmatpush2.bf16.msra.mxu0 0
        %519 = vmatprep.subr.bf16.mxu0 0
        %520 = vmatpush2.bf16.msra.mxu0 0
        %521 = vmatprep.subr.bf16.mxu0 0
        %522 = vmatpush2.bf16.msra.mxu0 0
        %523 = vmatprep.subr.bf16.mxu0 0
        %524 = vmatpush2.bf16.msra.mxu0 0
        %525 = vmatprep.mubr.bf16.mxu0 0
        %526 = vmatmul.mubr.bf16.gmra.mxu0 %v488
        %v527 = vpop.f32.mrf.mxu0
        %v528 = vadd.f32 %v466, %v527
        %v529 = vpop.f32.mrf.mxu0
        %v530 = vpop.f32.mrf.mxu0
        %v531 = vadd.f32 %v466, %v530
        %v532 = vpop.f32.mrf.mxu0
        %533 = vmatprep.mubr.bf16.mxu0 0
        %534 = vmatmul.mubr.bf16.gmra.mxu0 %v491
        %v535 = vpop.f32.mrf.mxu0
        %v536 = vadd.f32 %v466, %v535
        %v537 = vpop.f32.mrf.mxu0
        %v538 = vpop.f32.mrf.mxu0
        %v539 = vadd.f32 %v466, %v538
        %v540 = vpop.f32.mrf.mxu0
        %541 = vdwg.mxu0
        %vm542 = vcmask 785408
        %543 = vst.msk [vmem:[%s319] sm:$0xff] %vm542, %v528
        %544 = vst.msk [vmem:[%s319 + $0x8] sm:$0xff] %vm542, %v531
        %545 = vst.msk [vmem:[%s319 + $0x10] sm:$0xff] %vm542, %v536
        %546 = vst.msk [vmem:[%s319 + $0x18] sm:$0xff] %vm542, %v539
        %s547 = sand.u32 %s166, 1
        %s548 = sand.u32 %s166, 1
        %s549 = smul.addr %s548, 32
        %s550 = scalar_lea.vmem [#allocation2], %s549
        %s551 = sand.u32 %s192, 1
        %s552 = scalar_lea.sflag [#allocation4], %s551
        %s553 = sand.u32 %s192, 1
        %s554 = smul.addr %s553, 32
        %s555 = scalar_lea.vmem [#allocation3], %s554
        // Predicated region
        $region45: #{tpu_custom_call.1} parent=43 // pred_check
          %p556 = pneg %p176
        $region46: #{tpu_custom_call.1} parent=43 // pred_check_branch
          %558 = sbr.rel (%p556) target = $region48
        $region47: #{tpu_custom_call.1} parent=43 // pred_region
          %s559 = smul.u32 4, %s22
          %s560 = ssub.s32 9, %s559
          %p561 = scmp.lt.s32.totalorder %s560, 4
          %s562 = scalar_select %p561, %s560, 4
          %s563 = smul.u32 128, %s562
          %p564 = scmp.ne.s32.totalorder 0, %s563
          %s565 = smul.addr %s559, 8
          %s566 = scalar_lea.vmem %s6, %s565
          // Predicated region
          $region49: #{tpu_custom_call.1} parent=47 // pred_check
            %p567 = pneg %p564
          $region50: #{tpu_custom_call.1} parent=47 // pred_check_branch
            %569 = sbr.rel (%p567) target = $region52
          $region51: #{tpu_custom_call.1} parent=47 // pred_region
            // Predicated region
            $region53: #{tpu_custom_call.1} parent=51 // pred_check
              _
            $region54: #{tpu_custom_call.1} parent=51 // pred_check_branch
              %571 = sbr.rel (0) target = $region56
            $region55: #{tpu_custom_call.1} parent=51 // pred_region
              // Predicated region
              $region75: #{tpu_custom_call.1} parent=55 // pred_check
                _
              $region76: #{tpu_custom_call.1} parent=55 // pred_check_branch
                %627 = sbr.rel (0) target = $region78
              $region77: #{tpu_custom_call.1} parent=55 // pred_region
                %s628 = sshrl.u32 %s562, 2
                // While loop
                $region79: #{tpu_custom_call.1} parent=77 // loop_pre_header
                  _
                $region80: #{tpu_custom_call.1} parent=77 // loop_header
                  %s630 = sphi 0, %s632
                  %p631 = scmp.ge.s32.totalorder %s630, %s628
                  %s635 = sphi 0, %s648
                  %s636 = sphi %s550, %s651
                  %s637 = sphi %s566, %s652
                $region81: #{tpu_custom_call.1} parent=77 // loop_header_branch
                  %634 = sbr.rel (%p631) target = $region85
                $region82: #{tpu_custom_call.1} parent=77 // loop_body
                  %v638 = vld [vmem:[%s636] sm:$0xff]
                  %639 = vst [vmem:[%s637] sm:$0xff] %v638
                  %v640 = vld [vmem:[%s636 + $0x8] sm:$0xff]
                  %641 = vst [vmem:[%s637 + $0x8] sm:$0xff] %v640
                  %v642 = vld [vmem:[%s636 + $0x10] sm:$0xff]
                  %643 = vst [vmem:[%s637 + $0x10] sm:$0xff] %v642
                  %v644 = vld [vmem:[%s636 + $0x18] sm:$0xff]
                  %645 = vst [vmem:[%s637 + $0x18] sm:$0xff] %v644
                  %s646 = sadd.s32 1, %s635
                  %p647 = scmp.ge.s32.totalorder %s646, %s628
                  %s648 = scalar_select %p647, 0, %s646
                  %s649 = smul.u32 %s648, 32
                  %s650 = smul.u32 %s648, 32
                  %s651 = scalar_lea.vmem %s550, %s649 [#allocation2]
                  %s652 = scalar_lea.vmem %s566, %s650
                $region83: #{tpu_custom_call.1} parent=77 // loop_footer
                  %s632 = sadd.s32 %s630, 1
                $region84: #{tpu_custom_call.1} parent=77 // loop_footer_branch
                  %629 = sbr.rel target = $region80
                $region85: #{tpu_custom_call.1} parent=77 // loop_exit
                  _
                %s653 = sshrl.u32 %s562, 2
                %s654 = sand.u32 %s562, 3
                %s655 = smul.u32 %s653, 4
                %s656 = smul.u32 8, %s655
                %s657 = scalar_lea.vmem %s550, %s656 [#allocation2]
                %s658 = smul.u32 8, %s655
                %s659 = scalar_lea.vmem %s566, %s658
                // While loop
                $region86: #{tpu_custom_call.1} parent=77 // loop_pre_header
                  _
                $region87: #{tpu_custom_call.1} parent=77 // loop_header
                  %s661 = sphi 0, %s663
                  %p662 = scmp.ge.s32.totalorder %s661, %s654
                  %s666 = sphi 0, %s673
                  %s667 = sphi %s657, %s676
                  %s668 = sphi %s659, %s677
                $region88: #{tpu_custom_call.1} parent=77 // loop_header_branch
                  %665 = sbr.rel (%p662) target = $region92
                $region89: #{tpu_custom_call.1} parent=77 // loop_body
                  %v669 = vld [vmem:[%s667] sm:$0xff]
                  %670 = vst [vmem:[%s668] sm:$0xff] %v669
                  %s671 = sadd.s32 1, %s666
                  %p672 = scmp.ge.s32.totalorder %s671, %s654
                  %s673 = scalar_select %p672, 0, %s671
                  %s674 = smul.u32 %s673, 8
                  %s675 = smul.u32 %s673, 8
                  %s676 = scalar_lea.vmem %s657, %s674 [#allocation2]
                  %s677 = scalar_lea.vmem %s659, %s675
                $region90: #{tpu_custom_call.1} parent=77 // loop_footer
                  %s663 = sadd.s32 %s661, 1
                $region91: #{tpu_custom_call.1} parent=77 // loop_footer_branch
                  %660 = sbr.rel target = $region87
                $region92: #{tpu_custom_call.1} parent=77 // loop_exit
                  _
              $region78: #{tpu_custom_call.1} parent=55 // pred_fallthru
                _
              // Predicated region
              $region93: #{tpu_custom_call.1} parent=55 // pred_check
                _
              $region94: #{tpu_custom_call.1} parent=55 // pred_check_branch
                %679 = sbr.rel target = $region96
              $region95: #{tpu_custom_call.1} parent=55 // pred_region
                _
              $region96: #{tpu_custom_call.1} parent=55 // pred_fallthru
                _
            $region56: #{tpu_custom_call.1} parent=51 // pred_fallthru
              _
            // Predicated region
            $region57: #{tpu_custom_call.1} parent=51 // pred_check
              _
            $region58: #{tpu_custom_call.1} parent=51 // pred_check_branch
              %573 = sbr.rel target = $region60
            $region59: #{tpu_custom_call.1} parent=51 // pred_region
              %s575 = ssub.s32 256, 1
              %s576 = sshrl.u32 %s562, 2
              // While loop
              $region61: #{tpu_custom_call.1} parent=59 // loop_pre_header
                _
              $region62: #{tpu_custom_call.1} parent=59 // loop_header
                %s578 = sphi 0, %s580
                %p579 = scmp.ge.s32.totalorder %s578, %s576
                %s583 = sphi 0, %s596
                %s584 = sphi %s550, %s599
                %s585 = sphi %s566, %s600
              $region63: #{tpu_custom_call.1} parent=59 // loop_header_branch
                %582 = sbr.rel (%p579) target = $region67
              $region64: #{tpu_custom_call.1} parent=59 // loop_body
                %v586 = vld [vmem:[%s584] sm:%s575]
                %587 = vst [vmem:[%s585] sm:%s575] %v586
                %v588 = vld [vmem:[%s584 + $0x8] sm:%s575]
                %589 = vst [vmem:[%s585 + $0x8] sm:%s575] %v588
                %v590 = vld [vmem:[%s584 + $0x10] sm:%s575]
                %591 = vst [vmem:[%s585 + $0x10] sm:%s575] %v590
                %v592 = vld [vmem:[%s584 + $0x18] sm:%s575]
                %593 = vst [vmem:[%s585 + $0x18] sm:%s575] %v592
                %s594 = sadd.s32 1, %s583
                %p595 = scmp.ge.s32.totalorder %s594, %s576
                %s596 = scalar_select %p595, 0, %s594
                %s597 = smul.u32 %s596, 32
                %s598 = smul.u32 %s596, 32
                %s599 = scalar_lea.vmem %s550, %s597 [#allocation2]
                %s600 = scalar_lea.vmem %s566, %s598
              $region65: #{tpu_custom_call.1} parent=59 // loop_footer
                %s580 = sadd.s32 %s578, 1
              $region66: #{tpu_custom_call.1} parent=59 // loop_footer_branch
                %577 = sbr.rel target = $region62
              $region67: #{tpu_custom_call.1} parent=59 // loop_exit
                _
              %s601 = sshrl.u32 %s562, 2
              %s602 = sand.u32 %s562, 3
              %s603 = smul.u32 %s601, 4
              %s604 = smul.u32 8, %s603
              %s605 = scalar_lea.vmem %s550, %s604 [#allocation2]
              %s606 = smul.u32 8, %s603
              %s607 = scalar_lea.vmem %s566, %s606
              // While loop
              $region68: #{tpu_custom_call.1} parent=59 // loop_pre_header
                _
              $region69: #{tpu_custom_call.1} parent=59 // loop_header
                %s609 = sphi 0, %s611
                %p610 = scmp.ge.s32.totalorder %s609, %s602
                %s614 = sphi 0, %s621
                %s615 = sphi %s605, %s624
                %s616 = sphi %s607, %s625
              $region70: #{tpu_custom_call.1} parent=59 // loop_header_branch
                %613 = sbr.rel (%p610) target = $region74
              $region71: #{tpu_custom_call.1} parent=59 // loop_body
                %v617 = vld [vmem:[%s615] sm:%s575]
                %618 = vst [vmem:[%s616] sm:%s575] %v617
                %s619 = sadd.s32 1, %s614
                %p620 = scmp.ge.s32.totalorder %s619, %s602
                %s621 = scalar_select %p620, 0, %s619
                %s622 = smul.u32 %s621, 8
                %s623 = smul.u32 %s621, 8
                %s624 = scalar_lea.vmem %s605, %s622 [#allocation2]
                %s625 = scalar_lea.vmem %s607, %s623
              $region72: #{tpu_custom_call.1} parent=59 // loop_footer
                %s611 = sadd.s32 %s609, 1
              $region73: #{tpu_custom_call.1} parent=59 // loop_footer_branch
                %608 = sbr.rel target = $region69
              $region74: #{tpu_custom_call.1} parent=59 // loop_exit
                _
            $region60: #{tpu_custom_call.1} parent=51 // pred_fallthru
              _
          $region52: #{tpu_custom_call.1} parent=47 // pred_fallthru
            _
          %680 = vnop
        $region48: #{tpu_custom_call.1} parent=43 // pred_fallthru
          _
        // Predicated region
        $region97: #{tpu_custom_call.1} parent=43 // pred_check
          %p681 = pneg %p202
        $region98: #{tpu_custom_call.1} parent=43 // pred_check_branch
          %683 = sbr.rel (%p681) target = $region100
        $region99: #{tpu_custom_call.1} parent=43 // pred_region
          %s684 = smul.u32 4, %s22
          %s685 = ssub.s32 9, %s684
          %p686 = scmp.lt.s32.totalorder %s685, 4
          %s687 = scalar_select %p686, %s685, 4
          %s688 = smul.u32 128, %s687
          %s690 = ssub.s32 512, %s688
          %691 = vsyncadd %s552, %s690
          %p692 = scmp.ne.s32.totalorder 0, %s688
          %s693 = smul.addr %s684, 128
          %s694 = scalar_lea.hbm %s7, %s693
          %s695 = smul.u32 8, %s687
          %s696 = sshll.u32 %s555, 4
          %s697 = int_to_ptr.vmem [resolvable:$true] %s696
          %s698 = sshll.u32 %s695, 4
          %702 = dma.vmem_to_hbm [thread:$0]  (%p692), %s697, %s698, %s694, %s552, 128, 128, 8
        $region100: #{tpu_custom_call.1} parent=43 // pred_fallthru
          _
      $region44: #{tpu_custom_call.1} parent=5 // pred_fallthru
        _
      %p703 = scmp.le.s32.totalorder 2, %s17
      // Predicated region
      $region101: #{tpu_custom_call.1} parent=5 // pred_check
        %p704 = pneg %p703
      $region102: #{tpu_custom_call.1} parent=5 // pred_check_branch
        %706 = sbr.rel (%p704) target = $region104
      $region103: #{tpu_custom_call.1} parent=5 // pred_region
        %s707 = ssub.s32 %s17, 2
        // Predicated region
        $region105: #{tpu_custom_call.1} parent=103 // pred_check
          %p708 = pneg %p182
        $region106: #{tpu_custom_call.1} parent=103 // pred_check_branch
          %710 = sbr.rel (%p708) target = $region108
        $region107: #{tpu_custom_call.1} parent=103 // pred_region
          %s711 = sand.u32 %s167, 1
          %s712 = sand.u32 %s167, 1
          %s713 = smul.addr %s712, 32
          %s714 = scalar_lea.vmem [#allocation2], %s713
        $region108: #{tpu_custom_call.1} parent=103 // pred_fallthru
          _
        // Predicated region
        $region109: #{tpu_custom_call.1} parent=103 // pred_check
          %p715 = pneg %p208
        $region110: #{tpu_custom_call.1} parent=103 // pred_check_branch
          %717 = sbr.rel (%p715) target = $region112
        $region111: #{tpu_custom_call.1} parent=103 // pred_region
          %s718 = sand.u32 %s193, 1
          %s719 = scalar_lea.sflag [#allocation4], %s718
          %s720 = sand.u32 %s193, 1
          %s721 = smul.addr %s720, 32
          %s722 = scalar_lea.vmem [#allocation3], %s721
          %723 = dma.done %s719, 512
        $region112: #{tpu_custom_call.1} parent=103 // pred_fallthru
          _
      $region104: #{tpu_custom_call.1} parent=5 // pred_fallthru
        _
    $region6: #{tpu_custom_call.1} parent=1 // loop_footer
      %s21 = sadd.s32 1, %s17
    $region7: #{tpu_custom_call.1} parent=1 // loop_footer_branch
      %16 = sbr.rel target = $region3
    $region8: #{tpu_custom_call.1} parent=1 // loop_exit
      _
    %724 = vsyncpa [#allocation4], 1
    %s725 = scalar_lea.sflag [#allocation4], 1
    %726 = vsyncpa %s725, 1

</llo_original>
